<compile_context>
chip_gen: v7x
topology: tpu7x:2x2x1
jax: 0.10.0
libtpu: 0.0.40
codegen_flags: <defaults>
</compile_context>

<pallas_src>
import functools

import numpy as np
import jax
import jax.numpy as jnp
from jax import lax
from jax.experimental import pallas as pl
from jax.experimental.pallas import tpu as pltpu

EPS = 1e-5


def _divmod_const(v, d):
    """(v // d, v % d) for non-negative int32 array v and positive Python int d."""
    if d & (d - 1) == 0:
        s = d.bit_length() - 1
        return v >> s, v & (d - 1)
    return v // d, v % d


def _resblock_kernel(N, C1, C0, H, W, x_ref, pr1_ref, pr0_ref, o_ref):
    HW = H * W
    L = N * HW
    inv_l = 1.0 / L

    # --- one-time per-lane spatial coordinates (lane q = n*HW + h*W + w) -----
    q = lax.broadcasted_iota(jnp.int32, (1, L), 1)
    hq, w_idx = _divmod_const(q, W)          # hq = n*H + h
    _, h_idx = _divmod_const(hq, H)          # h

    # --- hoisted boundary masks for the 8 non-center taps (shared by both
    #     depthwise convs); they also zero every circular / cross-sample wrap.
    masks = {}
    for dy in (-1, 0, 1):
        for dx in (-1, 0, 1):
            if dy == 0 and dx == 0:
                continue
            conds = []
            if dy == -1:
                conds.append(h_idx >= 1)
            if dy == 1:
                conds.append(h_idx < H - 1)
            if dx == -1:
                conds.append(w_idx >= 1)
            if dx == 1:
                conds.append(w_idx < W - 1)
            m = conds[0]
            for c in conds[1:]:
                m = m & c
            masks[(dy, dx)] = m              # (1, L) bool

    # --- unpack packed per-channel parameter blocks --------------------------
    pr1 = pr1_ref[...]                       # (C1, 13 + C0)
    g1, b1, bd1, bp2 = pr1[:, 0:1], pr1[:, 1:2], pr1[:, 2:3], pr1[:, 3:4]
    wd1 = pr1[:, 4:13]                       # (C1, 9)
    m2 = pr1[:, 13:13 + C0]                  # (C1, C0) = wp2^T

    pr0 = pr0_ref[...]                       # (C0, 13 + C1)
    bp1, g2, b2, bd2 = pr0[:, 0:1], pr0[:, 1:2], pr0[:, 2:3], pr0[:, 3:4]
    wd2 = pr0[:, 4:13]                       # (C0, 9)
    m1 = pr0[:, 13:13 + C1]                  # (C0, C1) = wp1^T

    def bn_relu(t, g, b):
        # Training-mode BN: per-channel batch stats over N*H*W lanes
        # (pure lane reductions on the XLU; biased variance, two-pass).
        m = jnp.sum(t, axis=1, keepdims=True) * inv_l            # (C,1)
        d = t - m
        v = jnp.sum(d * d, axis=1, keepdims=True) * inv_l        # (C,1)
        y = d * (lax.rsqrt(v + EPS) * g) + b
        return jnp.maximum(y, 0.0)

    def dwconv3x3(t, wd, bd):
        # Depthwise 3x3, padding=1: 9 taps via XLU lane rotates + hoisted masks.
        acc = wd[:, 4:5] * t + bd            # center tap (dy=dx=0), bias folded
        for k in range(9):
            if k == 4:
                continue
            dy, dx = k // 3 - 1, k % 3 - 1
            off = dy * W + dx
            tap = pltpu.roll(t, shift=(-off) % L, axis=1)        # y[:,q]=t[:,q+off]
            acc = acc + wd[:, k:k + 1] * jnp.where(masks[(dy, dx)], tap, 0.0)
        return acc

    def pwconv1x1(t, m, bp):
        # Dense (Cout,Cin) x (Cin,L) MXU matmul; output lanes = N*H*W (dense).
        # TODO(synk): at scale, feed bf16 operands (keep f32 accumulation).
        return jnp.dot(m, t, preferred_element_type=jnp.float32) + bp

    x = x_ref[...]                                               # (C1, L)
    h = bn_relu(x, g1, b1)
    h = pwconv1x1(dwconv3x3(h, wd1, bd1), m1, bp1)               # (C0, L)
    h = bn_relu(h, g2, b2)
    o_ref[...] = pwconv1x1(dwconv3x3(h, wd2, bd2), m2, bp2)      # (C1, L)


@jax.jit
def res_block_forward(x_nchw, p):
    """x_nchw: (N, C1, H, W) float32. Returns (N, C1, H, W) float32."""
    N, C1, H, W = x_nchw.shape
    C0 = p["wp1"].shape[1]
    L = N * H * W
    f32 = jnp.float32

    # (C, N*H*W) lane-dense view (one tiny N<->C transpose in the wrapper).
    x2 = x_nchw.astype(f32).transpose(1, 0, 2, 3).reshape(C1, L)

    def col(v):                       # (C,) -> (C, 1)
        return v.astype(f32).reshape(-1, 1)

    def dw_cols(wd):                  # (3,3,C) -> (C, 9), col k = ky*3+kx
        return wd.astype(f32).reshape(9, -1).T

    # Packed per-channel parameter blocks (3 kernel inputs total).
    pr1 = jnp.concatenate(
        [col(p["g1"]), col(p["b1"]), col(p["bd1"]), col(p["bp2"]),
         dw_cols(p["wd1"]), p["wp2"].astype(f32).T], axis=1)     # (C1, 13+C0)
    pr0 = jnp.concatenate(
        [col(p["bp1"]), col(p["g2"]), col(p["b2"]), col(p["bd2"]),
         dw_cols(p["wd2"]), p["wp1"].astype(f32).T], axis=1)     # (C0, 13+C1)

    vmem = pl.BlockSpec(memory_space=pltpu.MemorySpace.VMEM)
    out = pl.pallas_call(
        functools.partial(_resblock_kernel, N, C1, C0, H, W),
        out_shape=jax.ShapeDtypeStruct((C1, L), f32),
        in_specs=[vmem, vmem, vmem],
        out_specs=vmem,
    )(x2, pr1, pr0)
    return out.reshape(C1, N, H, W).transpose(1, 0, 2, 3)


# ---------------- pure-JAX reference (for correctness check) ----------------
def ref_forward(x, p):
    def bn_relu(x, g, b):
        m = x.mean(axis=(0, 2, 3), keepdims=True)
        v = ((x - m) ** 2).mean(axis=(0, 2, 3), keepdims=True)
        y = (x - m) * lax.rsqrt(v + EPS) * g.reshape(1, -1, 1, 1) + b.reshape(1, -1, 1, 1)
        return jnp.maximum(y, 0.0)

    def dwconv(x, w, b):
        N, C, H, W = x.shape
        xp = jnp.pad(x, ((0, 0), (0, 0), (1, 1), (1, 1)))
        acc = sum(xp[:, :, ky:ky + H, kx:kx + W] * w[ky, kx].reshape(1, C, 1, 1)
                  for ky in range(3) for kx in range(3))
        return acc + b.reshape(1, C, 1, 1)

    def pwconv(x, w, b):   # exact f32 VPU math (no matmul precision ambiguity)
        cols = [(x * w[:, d].reshape(1, -1, 1, 1)).sum(axis=1)
                for d in range(w.shape[1])]
        return jnp.stack(cols, axis=1) + b.reshape(1, -1, 1, 1)

    h = pwconv(dwconv(bn_relu(x, p["g1"], p["b1"]), p["wd1"], p["bd1"]),
               p["wp1"], p["bp1"])
    h = pwconv(dwconv(bn_relu(h, p["g2"], p["b2"]), p["wd2"], p["bd2"]),
               p["wp2"], p["bp2"])
    return h


def make_params(key, nChannels, multiply):
    C1 = nChannels * multiply   # in/out channels of the block
    C0 = nChannels              # bottleneck channels
    ks = jax.random.split(key, 12)
    s = 0.1
    return {
        "g1": 1.0 + s * jax.random.normal(ks[0], (C1,), jnp.float32),
        "b1": s * jax.random.normal(ks[1], (C1,), jnp.float32),
        "g2": 1.0 + s * jax.random.normal(ks[2], (C0,), jnp.float32),
        "b2": s * jax.random.normal(ks[3], (C0,), jnp.float32),
        # convd1: depthwise 3x3 over C1  -> weight stored as (3,3,C1)
        "wd1": s * jax.random.normal(ks[4], (3, 3, C1), jnp.float32),
        "bd1": s * jax.random.normal(ks[5], (C1,), jnp.float32),
        # convp1: 1x1, C1 -> C0          -> weight stored as (C1,C0)
        "wp1": s * jax.random.normal(ks[6], (C1, C0), jnp.float32),
        "bp1": s * jax.random.normal(ks[7], (C0,), jnp.float32),
        # convd2: depthwise 3x3 over C0
        "wd2": s * jax.random.normal(ks[8], (3, 3, C0), jnp.float32),
        "bd2": s * jax.random.normal(ks[9], (C0,), jnp.float32),
        # convp2: 1x1, C0 -> C1
        "wp2": s * jax.random.normal(ks[10], (C0, C1), jnp.float32),
        "bp2": s * jax.random.normal(ks[11], (C1,), jnp.float32),
    }


if __name__ == "__main__":
    nChannels, multiply, att_rate = 4, 2, 0.5   # att_rate unused in forward
    N, H, W = 2, 16, 16
    C1 = nChannels * multiply

    key = jax.random.PRNGKey(0)
    kx, kp = jax.random.split(key)
    x = jax.random.normal(kx, (N, C1, H, W), jnp.float32)   # NCHW like PyTorch
    params = make_params(kp, nChannels, multiply)

    y = jax.block_until_ready(res_block_forward(x, params))
    y_ref = jax.block_until_ready(ref_forward(x, params))

    assert y.shape == (N, C1, H, W)
    np.testing.assert_allclose(np.asarray(y), np.asarray(y_ref), rtol=2e-3, atol=2e-3)

    print("KERNEL_OK")
</pallas_src>

<mosaic_0001>
module attributes {stable_mosaic.version = 11 : i64} {
  func.func @_resblock_kernel(%arg0: memref<8x512xf32, #tpu.memory_space<vmem>>, %arg1: memref<8x17xf32, #tpu.memory_space<vmem>>, %arg2: memref<4x21xf32, #tpu.memory_space<vmem>>, %arg3: memref<8x512xf32, #tpu.memory_space<vmem>>) attributes {dimension_semantics = [], scalar_prefetch = 0 : i64, scratch_operands = 0 : i64, tpu.core_type = #tpu.core_type<tc>} {
    %0 = tpu.iota {dimensions = array<i32: 1>} : vector<1x512xi32>
    %c4_i32 = arith.constant 4 : i32
    %1 = vector.broadcast %c4_i32 : i32 to vector<1x512xi32>
    %2 = arith.shrsi %0, %1 : vector<1x512xi32>
    %c15_i32 = arith.constant 15 : i32
    %3 = vector.broadcast %c15_i32 : i32 to vector<1x512xi32>
    %4 = arith.andi %0, %3 : vector<1x512xi32>
    %c15_i32_0 = arith.constant 15 : i32
    %5 = vector.broadcast %c15_i32_0 : i32 to vector<1x512xi32>
    %6 = arith.andi %2, %5 : vector<1x512xi32>
    %c1_i32 = arith.constant 1 : i32
    %7 = vector.broadcast %c1_i32 : i32 to vector<1x512xi32>
    %8 = arith.cmpi sge, %6, %7 : vector<1x512xi32>
    %c1_i32_1 = arith.constant 1 : i32
    %9 = vector.broadcast %c1_i32_1 : i32 to vector<1x512xi32>
    %10 = arith.cmpi sge, %4, %9 : vector<1x512xi32>
    %11 = arith.andi %8, %10 : vector<1x512xi1>
    %c1_i32_2 = arith.constant 1 : i32
    %12 = vector.broadcast %c1_i32_2 : i32 to vector<1x512xi32>
    %13 = arith.cmpi sge, %6, %12 : vector<1x512xi32>
    %c1_i32_3 = arith.constant 1 : i32
    %14 = vector.broadcast %c1_i32_3 : i32 to vector<1x512xi32>
    %15 = arith.cmpi sge, %6, %14 : vector<1x512xi32>
    %c15_i32_4 = arith.constant 15 : i32
    %16 = vector.broadcast %c15_i32_4 : i32 to vector<1x512xi32>
    %17 = arith.cmpi slt, %4, %16 : vector<1x512xi32>
    %18 = arith.andi %15, %17 : vector<1x512xi1>
    %c1_i32_5 = arith.constant 1 : i32
    %19 = vector.broadcast %c1_i32_5 : i32 to vector<1x512xi32>
    %20 = arith.cmpi sge, %4, %19 : vector<1x512xi32>
    %c15_i32_6 = arith.constant 15 : i32
    %21 = vector.broadcast %c15_i32_6 : i32 to vector<1x512xi32>
    %22 = arith.cmpi slt, %4, %21 : vector<1x512xi32>
    %c15_i32_7 = arith.constant 15 : i32
    %23 = vector.broadcast %c15_i32_7 : i32 to vector<1x512xi32>
    %24 = arith.cmpi slt, %6, %23 : vector<1x512xi32>
    %c1_i32_8 = arith.constant 1 : i32
    %25 = vector.broadcast %c1_i32_8 : i32 to vector<1x512xi32>
    %26 = arith.cmpi sge, %4, %25 : vector<1x512xi32>
    %27 = arith.andi %24, %26 : vector<1x512xi1>
    %c15_i32_9 = arith.constant 15 : i32
    %28 = vector.broadcast %c15_i32_9 : i32 to vector<1x512xi32>
    %29 = arith.cmpi slt, %6, %28 : vector<1x512xi32>
    %c15_i32_10 = arith.constant 15 : i32
    %30 = vector.broadcast %c15_i32_10 : i32 to vector<1x512xi32>
    %31 = arith.cmpi slt, %6, %30 : vector<1x512xi32>
    %c15_i32_11 = arith.constant 15 : i32
    %32 = vector.broadcast %c15_i32_11 : i32 to vector<1x512xi32>
    %33 = arith.cmpi slt, %4, %32 : vector<1x512xi32>
    %34 = arith.andi %31, %33 : vector<1x512xi1>
    %c0 = arith.constant 0 : index
    %c0_12 = arith.constant 0 : index
    %35 = vector.load %arg1[%c0, %c0_12] : memref<8x17xf32, #tpu.memory_space<vmem>>, vector<8x17xf32>
    %36 = vector.extract_strided_slice %35 {offsets = [0, 0], sizes = [8, 1], strides = [1, 1]} : vector<8x17xf32> to vector<8x1xf32>
    %37 = vector.extract_strided_slice %35 {offsets = [0, 1], sizes = [8, 1], strides = [1, 1]} : vector<8x17xf32> to vector<8x1xf32>
    %38 = vector.extract_strided_slice %35 {offsets = [0, 2], sizes = [8, 1], strides = [1, 1]} : vector<8x17xf32> to vector<8x1xf32>
    %39 = vector.extract_strided_slice %35 {offsets = [0, 3], sizes = [8, 1], strides = [1, 1]} : vector<8x17xf32> to vector<8x1xf32>
    %40 = vector.extract_strided_slice %35 {offsets = [0, 4], sizes = [8, 9], strides = [1, 1]} : vector<8x17xf32> to vector<8x9xf32>
    %41 = vector.extract_strided_slice %35 {offsets = [0, 13], sizes = [8, 4], strides = [1, 1]} : vector<8x17xf32> to vector<8x4xf32>
    %c0_13 = arith.constant 0 : index
    %c0_14 = arith.constant 0 : index
    %42 = vector.load %arg2[%c0_13, %c0_14] : memref<4x21xf32, #tpu.memory_space<vmem>>, vector<4x21xf32>
    %43 = vector.extract_strided_slice %42 {offsets = [0, 0], sizes = [4, 1], strides = [1, 1]} : vector<4x21xf32> to vector<4x1xf32>
    %44 = vector.extract_strided_slice %42 {offsets = [0, 1], sizes = [4, 1], strides = [1, 1]} : vector<4x21xf32> to vector<4x1xf32>
    %45 = vector.extract_strided_slice %42 {offsets = [0, 2], sizes = [4, 1], strides = [1, 1]} : vector<4x21xf32> to vector<4x1xf32>
    %46 = vector.extract_strided_slice %42 {offsets = [0, 3], sizes = [4, 1], strides = [1, 1]} : vector<4x21xf32> to vector<4x1xf32>
    %47 = vector.extract_strided_slice %42 {offsets = [0, 4], sizes = [4, 9], strides = [1, 1]} : vector<4x21xf32> to vector<4x9xf32>
    %48 = vector.extract_strided_slice %42 {offsets = [0, 13], sizes = [4, 8], strides = [1, 1]} : vector<4x21xf32> to vector<4x8xf32>
    %c0_15 = arith.constant 0 : index
    %c0_16 = arith.constant 0 : index
    %49 = vector.load %arg0[%c0_15, %c0_16] : memref<8x512xf32, #tpu.memory_space<vmem>>, vector<8x512xf32>
    %cst = arith.constant dense<0.000000e+00> : vector<8xf32>
    %50 = vector.multi_reduction <add>, %49, %cst [1] : vector<8x512xf32> to vector<8xf32>
    %51 = vector.shape_cast %50 : vector<8xf32> to vector<8x1xf32>
    %cst_17 = arith.constant 0.001953125 : f32
    %52 = vector.broadcast %cst_17 : f32 to vector<8x1xf32>
    %53 = arith.mulf %51, %52 : vector<8x1xf32>
    %54 = vector.broadcast %53 : vector<8x1xf32> to vector<8x512xf32>
    %55 = arith.subf %49, %54 : vector<8x512xf32>
    %56 = arith.mulf %55, %55 : vector<8x512xf32>
    %cst_18 = arith.constant dense<0.000000e+00> : vector<8xf32>
    %57 = vector.multi_reduction <add>, %56, %cst_18 [1] : vector<8x512xf32> to vector<8xf32>
    %58 = vector.shape_cast %57 : vector<8xf32> to vector<8x1xf32>
    %cst_19 = arith.constant 0.001953125 : f32
    %59 = vector.broadcast %cst_19 : f32 to vector<8x1xf32>
    %60 = arith.mulf %58, %59 : vector<8x1xf32>
    %cst_20 = arith.constant 9.99999974E-6 : f32
    %61 = vector.broadcast %cst_20 : f32 to vector<8x1xf32>
    %62 = arith.addf %60, %61 : vector<8x1xf32>
    %63 = math.rsqrt %62 : vector<8x1xf32>
    %64 = arith.mulf %63, %36 : vector<8x1xf32>
    %65 = vector.broadcast %64 : vector<8x1xf32> to vector<8x512xf32>
    %66 = arith.mulf %55, %65 : vector<8x512xf32>
    %67 = vector.broadcast %37 : vector<8x1xf32> to vector<8x512xf32>
    %68 = arith.addf %66, %67 : vector<8x512xf32>
    %cst_21 = arith.constant 0.000000e+00 : f32
    %69 = vector.broadcast %cst_21 : f32 to vector<8x512xf32>
    %70 = arith.maximumf %68, %69 : vector<8x512xf32>
    %71 = vector.extract_strided_slice %40 {offsets = [0, 4], sizes = [8, 1], strides = [1, 1]} : vector<8x9xf32> to vector<8x1xf32>
    %72 = vector.broadcast %71 : vector<8x1xf32> to vector<8x512xf32>
    %73 = arith.mulf %72, %70 : vector<8x512xf32>
    %74 = vector.broadcast %38 : vector<8x1xf32> to vector<8x512xf32>
    %75 = arith.addf %73, %74 : vector<8x512xf32>
    %c17_i32 = arith.constant 17 : i32
    %76 = tpu.dynamic_rotate %70 by %c17_i32 dim 1 : vector<8x512xf32>, i32 -> vector<8x512xf32>
    %77 = vector.extract_strided_slice %40 {offsets = [0, 0], sizes = [8, 1], strides = [1, 1]} : vector<8x9xf32> to vector<8x1xf32>
    %cst_22 = arith.constant 0.000000e+00 : f32
    %78 = vector.shape_cast %11 : vector<1x512xi1> to vector<1x512xi1>
    %79 = vector.broadcast %78 : vector<1x512xi1> to vector<8x512xi1>
    %80 = vector.broadcast %cst_22 : f32 to vector<8x512xf32>
    %81 = arith.select %79, %76, %80 : vector<8x512xi1>, vector<8x512xf32>
    %82 = vector.broadcast %77 : vector<8x1xf32> to vector<8x512xf32>
    %83 = arith.mulf %82, %81 : vector<8x512xf32>
    %84 = arith.addf %75, %83 : vector<8x512xf32>
    %c16_i32 = arith.constant 16 : i32
    %85 = tpu.dynamic_rotate %70 by %c16_i32 dim 1 : vector<8x512xf32>, i32 -> vector<8x512xf32>
    %86 = vector.extract_strided_slice %40 {offsets = [0, 1], sizes = [8, 1], strides = [1, 1]} : vector<8x9xf32> to vector<8x1xf32>
    %cst_23 = arith.constant 0.000000e+00 : f32
    %87 = vector.shape_cast %13 : vector<1x512xi1> to vector<1x512xi1>
    %88 = vector.broadcast %87 : vector<1x512xi1> to vector<8x512xi1>
    %89 = vector.broadcast %cst_23 : f32 to vector<8x512xf32>
    %90 = arith.select %88, %85, %89 : vector<8x512xi1>, vector<8x512xf32>
    %91 = vector.broadcast %86 : vector<8x1xf32> to vector<8x512xf32>
    %92 = arith.mulf %91, %90 : vector<8x512xf32>
    %93 = arith.addf %84, %92 : vector<8x512xf32>
    %c15_i32_24 = arith.constant 15 : i32
    %94 = tpu.dynamic_rotate %70 by %c15_i32_24 dim 1 : vector<8x512xf32>, i32 -> vector<8x512xf32>
    %95 = vector.extract_strided_slice %40 {offsets = [0, 2], sizes = [8, 1], strides = [1, 1]} : vector<8x9xf32> to vector<8x1xf32>
    %cst_25 = arith.constant 0.000000e+00 : f32
    %96 = vector.shape_cast %18 : vector<1x512xi1> to vector<1x512xi1>
    %97 = vector.broadcast %96 : vector<1x512xi1> to vector<8x512xi1>
    %98 = vector.broadcast %cst_25 : f32 to vector<8x512xf32>
    %99 = arith.select %97, %94, %98 : vector<8x512xi1>, vector<8x512xf32>
    %100 = vector.broadcast %95 : vector<8x1xf32> to vector<8x512xf32>
    %101 = arith.mulf %100, %99 : vector<8x512xf32>
    %102 = arith.addf %93, %101 : vector<8x512xf32>
    %c1_i32_26 = arith.constant 1 : i32
    %103 = tpu.dynamic_rotate %70 by %c1_i32_26 dim 1 : vector<8x512xf32>, i32 -> vector<8x512xf32>
    %104 = vector.extract_strided_slice %40 {offsets = [0, 3], sizes = [8, 1], strides = [1, 1]} : vector<8x9xf32> to vector<8x1xf32>
    %cst_27 = arith.constant 0.000000e+00 : f32
    %105 = vector.shape_cast %20 : vector<1x512xi1> to vector<1x512xi1>
    %106 = vector.broadcast %105 : vector<1x512xi1> to vector<8x512xi1>
    %107 = vector.broadcast %cst_27 : f32 to vector<8x512xf32>
    %108 = arith.select %106, %103, %107 : vector<8x512xi1>, vector<8x512xf32>
    %109 = vector.broadcast %104 : vector<8x1xf32> to vector<8x512xf32>
    %110 = arith.mulf %109, %108 : vector<8x512xf32>
    %111 = arith.addf %102, %110 : vector<8x512xf32>
    %c511_i32 = arith.constant 511 : i32
    %112 = tpu.dynamic_rotate %70 by %c511_i32 dim 1 : vector<8x512xf32>, i32 -> vector<8x512xf32>
    %113 = vector.extract_strided_slice %40 {offsets = [0, 5], sizes = [8, 1], strides = [1, 1]} : vector<8x9xf32> to vector<8x1xf32>
    %cst_28 = arith.constant 0.000000e+00 : f32
    %114 = vector.shape_cast %22 : vector<1x512xi1> to vector<1x512xi1>
    %115 = vector.broadcast %114 : vector<1x512xi1> to vector<8x512xi1>
    %116 = vector.broadcast %cst_28 : f32 to vector<8x512xf32>
    %117 = arith.select %115, %112, %116 : vector<8x512xi1>, vector<8x512xf32>
    %118 = vector.broadcast %113 : vector<8x1xf32> to vector<8x512xf32>
    %119 = arith.mulf %118, %117 : vector<8x512xf32>
    %120 = arith.addf %111, %119 : vector<8x512xf32>
    %c497_i32 = arith.constant 497 : i32
    %121 = tpu.dynamic_rotate %70 by %c497_i32 dim 1 : vector<8x512xf32>, i32 -> vector<8x512xf32>
    %122 = vector.extract_strided_slice %40 {offsets = [0, 6], sizes = [8, 1], strides = [1, 1]} : vector<8x9xf32> to vector<8x1xf32>
    %cst_29 = arith.constant 0.000000e+00 : f32
    %123 = vector.shape_cast %27 : vector<1x512xi1> to vector<1x512xi1>
    %124 = vector.broadcast %123 : vector<1x512xi1> to vector<8x512xi1>
    %125 = vector.broadcast %cst_29 : f32 to vector<8x512xf32>
    %126 = arith.select %124, %121, %125 : vector<8x512xi1>, vector<8x512xf32>
    %127 = vector.broadcast %122 : vector<8x1xf32> to vector<8x512xf32>
    %128 = arith.mulf %127, %126 : vector<8x512xf32>
    %129 = arith.addf %120, %128 : vector<8x512xf32>
    %c496_i32 = arith.constant 496 : i32
    %130 = tpu.dynamic_rotate %70 by %c496_i32 dim 1 : vector<8x512xf32>, i32 -> vector<8x512xf32>
    %131 = vector.extract_strided_slice %40 {offsets = [0, 7], sizes = [8, 1], strides = [1, 1]} : vector<8x9xf32> to vector<8x1xf32>
    %cst_30 = arith.constant 0.000000e+00 : f32
    %132 = vector.shape_cast %29 : vector<1x512xi1> to vector<1x512xi1>
    %133 = vector.broadcast %132 : vector<1x512xi1> to vector<8x512xi1>
    %134 = vector.broadcast %cst_30 : f32 to vector<8x512xf32>
    %135 = arith.select %133, %130, %134 : vector<8x512xi1>, vector<8x512xf32>
    %136 = vector.broadcast %131 : vector<8x1xf32> to vector<8x512xf32>
    %137 = arith.mulf %136, %135 : vector<8x512xf32>
    %138 = arith.addf %129, %137 : vector<8x512xf32>
    %c495_i32 = arith.constant 495 : i32
    %139 = tpu.dynamic_rotate %70 by %c495_i32 dim 1 : vector<8x512xf32>, i32 -> vector<8x512xf32>
    %140 = vector.extract_strided_slice %40 {offsets = [0, 8], sizes = [8, 1], strides = [1, 1]} : vector<8x9xf32> to vector<8x1xf32>
    %cst_31 = arith.constant 0.000000e+00 : f32
    %141 = vector.shape_cast %34 : vector<1x512xi1> to vector<1x512xi1>
    %142 = vector.broadcast %141 : vector<1x512xi1> to vector<8x512xi1>
    %143 = vector.broadcast %cst_31 : f32 to vector<8x512xf32>
    %144 = arith.select %142, %139, %143 : vector<8x512xi1>, vector<8x512xf32>
    %145 = vector.broadcast %140 : vector<8x1xf32> to vector<8x512xf32>
    %146 = arith.mulf %145, %144 : vector<8x512xf32>
    %147 = arith.addf %138, %146 : vector<8x512xf32>
    %cst_32 = arith.constant dense<0.000000e+00> : vector<4x512xf32>
    %148 = tpu.matmul %48, %147, %cst_32 {dimension_numbers = #tpu.dot_dimension_numbers<[1], [0], [0], [1], [0, 0, 1, 1], [], []>} : vector<4x8xf32>, vector<8x512xf32>, vector<4x512xf32> -> vector<4x512xf32>
    %149 = vector.broadcast %43 : vector<4x1xf32> to vector<4x512xf32>
    %150 = arith.addf %148, %149 : vector<4x512xf32>
    %cst_33 = arith.constant dense<0.000000e+00> : vector<4xf32>
    %151 = vector.multi_reduction <add>, %150, %cst_33 [1] : vector<4x512xf32> to vector<4xf32>
    %152 = vector.shape_cast %151 : vector<4xf32> to vector<4x1xf32>
    %cst_34 = arith.constant 0.001953125 : f32
    %153 = vector.broadcast %cst_34 : f32 to vector<4x1xf32>
    %154 = arith.mulf %152, %153 : vector<4x1xf32>
    %155 = vector.broadcast %154 : vector<4x1xf32> to vector<4x512xf32>
    %156 = arith.subf %150, %155 : vector<4x512xf32>
    %157 = arith.mulf %156, %156 : vector<4x512xf32>
    %cst_35 = arith.constant dense<0.000000e+00> : vector<4xf32>
    %158 = vector.multi_reduction <add>, %157, %cst_35 [1] : vector<4x512xf32> to vector<4xf32>
    %159 = vector.shape_cast %158 : vector<4xf32> to vector<4x1xf32>
    %cst_36 = arith.constant 0.001953125 : f32
    %160 = vector.broadcast %cst_36 : f32 to vector<4x1xf32>
    %161 = arith.mulf %159, %160 : vector<4x1xf32>
    %cst_37 = arith.constant 9.99999974E-6 : f32
    %162 = vector.broadcast %cst_37 : f32 to vector<4x1xf32>
    %163 = arith.addf %161, %162 : vector<4x1xf32>
    %164 = math.rsqrt %163 : vector<4x1xf32>
    %165 = arith.mulf %164, %44 : vector<4x1xf32>
    %166 = vector.broadcast %165 : vector<4x1xf32> to vector<4x512xf32>
    %167 = arith.mulf %156, %166 : vector<4x512xf32>
    %168 = vector.broadcast %45 : vector<4x1xf32> to vector<4x512xf32>
    %169 = arith.addf %167, %168 : vector<4x512xf32>
    %cst_38 = arith.constant 0.000000e+00 : f32
    %170 = vector.broadcast %cst_38 : f32 to vector<4x512xf32>
    %171 = arith.maximumf %169, %170 : vector<4x512xf32>
    %172 = vector.extract_strided_slice %47 {offsets = [0, 4], sizes = [4, 1], strides = [1, 1]} : vector<4x9xf32> to vector<4x1xf32>
    %173 = vector.broadcast %172 : vector<4x1xf32> to vector<4x512xf32>
    %174 = arith.mulf %173, %171 : vector<4x512xf32>
    %175 = vector.broadcast %46 : vector<4x1xf32> to vector<4x512xf32>
    %176 = arith.addf %174, %175 : vector<4x512xf32>
    %c17_i32_39 = arith.constant 17 : i32
    %177 = tpu.dynamic_rotate %171 by %c17_i32_39 dim 1 : vector<4x512xf32>, i32 -> vector<4x512xf32>
    %178 = vector.extract_strided_slice %47 {offsets = [0, 0], sizes = [4, 1], strides = [1, 1]} : vector<4x9xf32> to vector<4x1xf32>
    %cst_40 = arith.constant 0.000000e+00 : f32
    %179 = vector.shape_cast %11 : vector<1x512xi1> to vector<1x512xi1>
    %180 = vector.broadcast %179 : vector<1x512xi1> to vector<4x512xi1>
    %181 = vector.broadcast %cst_40 : f32 to vector<4x512xf32>
    %182 = arith.select %180, %177, %181 : vector<4x512xi1>, vector<4x512xf32>
    %183 = vector.broadcast %178 : vector<4x1xf32> to vector<4x512xf32>
    %184 = arith.mulf %183, %182 : vector<4x512xf32>
    %185 = arith.addf %176, %184 : vector<4x512xf32>
    %c16_i32_41 = arith.constant 16 : i32
    %186 = tpu.dynamic_rotate %171 by %c16_i32_41 dim 1 : vector<4x512xf32>, i32 -> vector<4x512xf32>
    %187 = vector.extract_strided_slice %47 {offsets = [0, 1], sizes = [4, 1], strides = [1, 1]} : vector<4x9xf32> to vector<4x1xf32>
    %cst_42 = arith.constant 0.000000e+00 : f32
    %188 = vector.shape_cast %13 : vector<1x512xi1> to vector<1x512xi1>
    %189 = vector.broadcast %188 : vector<1x512xi1> to vector<4x512xi1>
    %190 = vector.broadcast %cst_42 : f32 to vector<4x512xf32>
    %191 = arith.select %189, %186, %190 : vector<4x512xi1>, vector<4x512xf32>
    %192 = vector.broadcast %187 : vector<4x1xf32> to vector<4x512xf32>
    %193 = arith.mulf %192, %191 : vector<4x512xf32>
    %194 = arith.addf %185, %193 : vector<4x512xf32>
    %c15_i32_43 = arith.constant 15 : i32
    %195 = tpu.dynamic_rotate %171 by %c15_i32_43 dim 1 : vector<4x512xf32>, i32 -> vector<4x512xf32>
    %196 = vector.extract_strided_slice %47 {offsets = [0, 2], sizes = [4, 1], strides = [1, 1]} : vector<4x9xf32> to vector<4x1xf32>
    %cst_44 = arith.constant 0.000000e+00 : f32
    %197 = vector.shape_cast %18 : vector<1x512xi1> to vector<1x512xi1>
    %198 = vector.broadcast %197 : vector<1x512xi1> to vector<4x512xi1>
    %199 = vector.broadcast %cst_44 : f32 to vector<4x512xf32>
    %200 = arith.select %198, %195, %199 : vector<4x512xi1>, vector<4x512xf32>
    %201 = vector.broadcast %196 : vector<4x1xf32> to vector<4x512xf32>
    %202 = arith.mulf %201, %200 : vector<4x512xf32>
    %203 = arith.addf %194, %202 : vector<4x512xf32>
    %c1_i32_45 = arith.constant 1 : i32
    %204 = tpu.dynamic_rotate %171 by %c1_i32_45 dim 1 : vector<4x512xf32>, i32 -> vector<4x512xf32>
    %205 = vector.extract_strided_slice %47 {offsets = [0, 3], sizes = [4, 1], strides = [1, 1]} : vector<4x9xf32> to vector<4x1xf32>
    %cst_46 = arith.constant 0.000000e+00 : f32
    %206 = vector.shape_cast %20 : vector<1x512xi1> to vector<1x512xi1>
    %207 = vector.broadcast %206 : vector<1x512xi1> to vector<4x512xi1>
    %208 = vector.broadcast %cst_46 : f32 to vector<4x512xf32>
    %209 = arith.select %207, %204, %208 : vector<4x512xi1>, vector<4x512xf32>
    %210 = vector.broadcast %205 : vector<4x1xf32> to vector<4x512xf32>
    %211 = arith.mulf %210, %209 : vector<4x512xf32>
    %212 = arith.addf %203, %211 : vector<4x512xf32>
    %c511_i32_47 = arith.constant 511 : i32
    %213 = tpu.dynamic_rotate %171 by %c511_i32_47 dim 1 : vector<4x512xf32>, i32 -> vector<4x512xf32>
    %214 = vector.extract_strided_slice %47 {offsets = [0, 5], sizes = [4, 1], strides = [1, 1]} : vector<4x9xf32> to vector<4x1xf32>
    %cst_48 = arith.constant 0.000000e+00 : f32
    %215 = vector.shape_cast %22 : vector<1x512xi1> to vector<1x512xi1>
    %216 = vector.broadcast %215 : vector<1x512xi1> to vector<4x512xi1>
    %217 = vector.broadcast %cst_48 : f32 to vector<4x512xf32>
    %218 = arith.select %216, %213, %217 : vector<4x512xi1>, vector<4x512xf32>
    %219 = vector.broadcast %214 : vector<4x1xf32> to vector<4x512xf32>
    %220 = arith.mulf %219, %218 : vector<4x512xf32>
    %221 = arith.addf %212, %220 : vector<4x512xf32>
    %c497_i32_49 = arith.constant 497 : i32
    %222 = tpu.dynamic_rotate %171 by %c497_i32_49 dim 1 : vector<4x512xf32>, i32 -> vector<4x512xf32>
    %223 = vector.extract_strided_slice %47 {offsets = [0, 6], sizes = [4, 1], strides = [1, 1]} : vector<4x9xf32> to vector<4x1xf32>
    %cst_50 = arith.constant 0.000000e+00 : f32
    %224 = vector.shape_cast %27 : vector<1x512xi1> to vector<1x512xi1>
    %225 = vector.broadcast %224 : vector<1x512xi1> to vector<4x512xi1>
    %226 = vector.broadcast %cst_50 : f32 to vector<4x512xf32>
    %227 = arith.select %225, %222, %226 : vector<4x512xi1>, vector<4x512xf32>
    %228 = vector.broadcast %223 : vector<4x1xf32> to vector<4x512xf32>
    %229 = arith.mulf %228, %227 : vector<4x512xf32>
    %230 = arith.addf %221, %229 : vector<4x512xf32>
    %c496_i32_51 = arith.constant 496 : i32
    %231 = tpu.dynamic_rotate %171 by %c496_i32_51 dim 1 : vector<4x512xf32>, i32 -> vector<4x512xf32>
    %232 = vector.extract_strided_slice %47 {offsets = [0, 7], sizes = [4, 1], strides = [1, 1]} : vector<4x9xf32> to vector<4x1xf32>
    %cst_52 = arith.constant 0.000000e+00 : f32
    %233 = vector.shape_cast %29 : vector<1x512xi1> to vector<1x512xi1>
    %234 = vector.broadcast %233 : vector<1x512xi1> to vector<4x512xi1>
    %235 = vector.broadcast %cst_52 : f32 to vector<4x512xf32>
    %236 = arith.select %234, %231, %235 : vector<4x512xi1>, vector<4x512xf32>
    %237 = vector.broadcast %232 : vector<4x1xf32> to vector<4x512xf32>
    %238 = arith.mulf %237, %236 : vector<4x512xf32>
    %239 = arith.addf %230, %238 : vector<4x512xf32>
    %c495_i32_53 = arith.constant 495 : i32
    %240 = tpu.dynamic_rotate %171 by %c495_i32_53 dim 1 : vector<4x512xf32>, i32 -> vector<4x512xf32>
    %241 = vector.extract_strided_slice %47 {offsets = [0, 8], sizes = [4, 1], strides = [1, 1]} : vector<4x9xf32> to vector<4x1xf32>
    %cst_54 = arith.constant 0.000000e+00 : f32
    %242 = vector.shape_cast %34 : vector<1x512xi1> to vector<1x512xi1>
    %243 = vector.broadcast %242 : vector<1x512xi1> to vector<4x512xi1>
    %244 = vector.broadcast %cst_54 : f32 to vector<4x512xf32>
    %245 = arith.select %243, %240, %244 : vector<4x512xi1>, vector<4x512xf32>
    %246 = vector.broadcast %241 : vector<4x1xf32> to vector<4x512xf32>
    %247 = arith.mulf %246, %245 : vector<4x512xf32>
    %248 = arith.addf %239, %247 : vector<4x512xf32>
    %cst_55 = arith.constant dense<0.000000e+00> : vector<8x512xf32>
    %249 = tpu.matmul %41, %248, %cst_55 {dimension_numbers = #tpu.dot_dimension_numbers<[1], [0], [0], [1], [0, 0, 1, 1], [], []>} : vector<8x4xf32>, vector<4x512xf32>, vector<8x512xf32> -> vector<8x512xf32>
    %250 = vector.broadcast %39 : vector<8x1xf32> to vector<8x512xf32>
    %251 = arith.addf %249, %250 : vector<8x512xf32>
    %c0_56 = arith.constant 0 : index
    %c0_57 = arith.constant 0 : index
    %252 = vector.load %arg3[%c0_56, %c0_57] : memref<8x512xf32, #tpu.memory_space<vmem>>, vector<8x512xf32>
    tpu.vector_store %arg3[%c0_56, %c0_57], %251 {strides = array<i32>} : memref<8x512xf32, #tpu.memory_space<vmem>>, vector<8x512xf32>,
    return
  }
}

</mosaic_0001>

<llo_original>
// kernel: res_block_forward.1
$region0: #{res_block_forward.1}
  #allocation0 [shape = 'u32[]', space=smem, size = 0x4, offset = 0x4, fixed_abs, tag = 'smem constant byte address 0x4 - core index']
  #allocation1 [shape = 'u32[144,128]{1,0:T(1,128)}', space=vmem, size = 0x12000, scoped, tag = 'internal scratch']
  %s0 = inlined_call_operand.vmem [shape: f32[8,512], index: 0, kind: input, shape index: {}]
  %s1 = inlined_call_operand.vmem [shape: f32[8,17], index: 1, kind: input, shape index: {}]
  %s2 = inlined_call_operand.vmem [shape: f32[4,21], index: 2, kind: input, shape index: {}]
  %s3 = inlined_call_operand.vmem [shape: f32[8,512], index: 3, kind: output, shape index: {}]
  %s4 = sld [smem:[#allocation0]]
  $region22: #{res_block_forward.1} parent=0
    _
  %s6 = ssub.s32 1, %s4
  %s7 = scalar_select 0, %s6, %s4
  // Predicated region
  $region2: #{res_block_forward.1} parent=0 // pred_check
    _
  $region3: #{res_block_forward.1} parent=0 // pred_check_branch
    %9 = sbr.rel (0) target = $region5
  $region4: #{res_block_forward.1} parent=0 // pred_region
    _
  $region5: #{res_block_forward.1} parent=0 // pred_fallthru
    _
  // Predicated region
  $region6: #{res_block_forward.1} parent=0 // pred_check
    _
  $region7: #{res_block_forward.1} parent=0 // pred_check_branch
    %11 = sbr.rel (0) target = $region9
  $region8: #{res_block_forward.1} parent=0 // pred_region
    _
  $region9: #{res_block_forward.1} parent=0 // pred_fallthru
    _
  // Predicated region
  $region10: #{res_block_forward.1} parent=0 // pred_check
    _
  $region11: #{res_block_forward.1} parent=0 // pred_check_branch
    %13 = sbr.rel (0) target = $region13
  $region12: #{res_block_forward.1} parent=0 // pred_region
    _
  $region13: #{res_block_forward.1} parent=0 // pred_fallthru
    _
  %v14 = vlaneseq
  %v15 = vand.u32 %v14, 127
  %v16 = vadd.s32 %v15, 128
  %v17 = vadd.s32 %v15, 256
  %v18 = vadd.s32 %v15, 384
  %v19 = vshra.s32 %v15, 4
  %v20 = vshra.s32 %v16, 4
  %v21 = vshra.s32 %v17, 4
  %v22 = vshra.s32 %v18, 4
  %v23 = vand.u32 %v15, 15
  %v24 = vand.u32 %v16, 15
  %v25 = vand.u32 %v17, 15
  %v26 = vand.u32 %v18, 15
  %v27 = vand.u32 %v19, 15
  %v28 = vand.u32 %v20, 15
  %v29 = vand.u32 %v21, 15
  %v30 = vand.u32 %v22, 15
  %vm31 = vcmp.ge.s32.totalorder %v27, 1
  %vm32 = vcmp.ge.s32.totalorder %v28, 1
  %vm33 = vcmp.ge.s32.totalorder %v29, 1
  %vm34 = vcmp.ge.s32.totalorder %v30, 1
  %vm35 = vcmp.ge.s32.totalorder %v23, 1
  %vm36 = vcmp.ge.s32.totalorder %v24, 1
  %vm37 = vcmp.ge.s32.totalorder %v25, 1
  %vm38 = vcmp.ge.s32.totalorder %v26, 1
  %vm39 = vmand %vm31, %vm35
  %vm40 = vmand %vm32, %vm36
  %vm41 = vmand %vm33, %vm37
  %vm42 = vmand %vm34, %vm38
  %vm43 = vcmp.lt.s32.totalorder %v23, 15
  %vm44 = vcmp.lt.s32.totalorder %v24, 15
  %vm45 = vcmp.lt.s32.totalorder %v25, 15
  %vm46 = vcmp.lt.s32.totalorder %v26, 15
  %vm47 = vmand %vm31, %vm43
  %vm48 = vmand %vm32, %vm44
  %vm49 = vmand %vm33, %vm45
  %vm50 = vmand %vm34, %vm46
  %vm51 = vcmp.lt.s32.totalorder %v27, 15
  %vm52 = vcmp.lt.s32.totalorder %v28, 15
  %vm53 = vcmp.lt.s32.totalorder %v29, 15
  %vm54 = vcmp.lt.s32.totalorder %v30, 15
  %vm55 = vmand %vm51, %vm35
  %vm56 = vmand %vm52, %vm36
  %vm57 = vmand %vm53, %vm37
  %vm58 = vmand %vm54, %vm38
  %vm59 = vmand %vm51, %vm43
  %vm60 = vmand %vm52, %vm44
  %vm61 = vmand %vm53, %vm45
  %vm62 = vmand %vm54, %vm46
  %v63 = vld [vmem:[%s1] sm:$0xff]
  %v64 = vld [vmem:[%s2] sm:$0xf]
  %v65 = vld [vmem:[%s0] sm:$0xff]
  %v66 = vld [vmem:[%s0 + $0x8] sm:$0xff]
  %v67 = vld [vmem:[%s0 + $0x10] sm:$0xff]
  %v68 = vld [vmem:[%s0 + $0x18] sm:$0xff]
  %v69 = vadd.f32 %v65, %v66
  %v70 = vadd.f32 %v69, %v67
  %v71 = vadd.f32 %v70, %v68
  %72 = vadd.xlane.f32.xlu0 %v71
  %v73 = vpop.xlane.xlu0 %72
  %v74 = vmul.f32 %v73, 0.001953125
  %v75 = vsub.f32 %v65, %v74
  %v76 = vsub.f32 %v66, %v74
  %v77 = vsub.f32 %v67, %v74
  %v78 = vsub.f32 %v68, %v74
  %v79 = vmul.f32 %v75, %v75
  %v80 = vmul.f32 %v76, %v76
  %v81 = vmul.f32 %v77, %v77
  %v82 = vmul.f32 %v78, %v78
  %v83 = vadd.f32 %v79, %v80
  %v84 = vadd.f32 %v83, %v81
  %v85 = vadd.f32 %v84, %v82
  %86 = vadd.xlane.f32.xlu0 %v85
  %v87 = vpop.xlane.xlu0 %86
  %v88 = vmul.f32 %v87, 0.001953125
  %v89 = vadd.f32 %v88, 1e-05
  %v90 = vrsqrt.pop %v89
  %v91 = vmul.f32 %v90, %v63
  %93 = vset.pattern.permute.xlu0 0
  %94 = vperm.xlu0 %93, %v91
  %v95 = vpop.permute.xlu0 %94
  %v97 = vmul.f32 %v75, %v95
  %v98 = vmul.f32 %v76, %v95
  %v99 = vmul.f32 %v77, %v95
  %v100 = vmul.f32 %v78, %v95
  %102 = vset.pattern.permute.xlu0 1
  %103 = vperm.xlu0 %102, %v63
  %v104 = vpop.permute.xlu0 %103
  %v106 = vadd.f32 %v97, %v104
  %v107 = vadd.f32 %v98, %v104
  %v108 = vadd.f32 %v99, %v104
  %v109 = vadd.f32 %v100, %v104
  %v110 = vmax.f32 %v106, 0.0
  %v111 = vmax.f32 %v107, 0.0
  %v112 = vmax.f32 %v108, 0.0
  %v113 = vmax.f32 %v109, 0.0
  %114 = vset.pattern.permute.xlu0 8
  %115 = vperm.xlu0 %114, %v63
  %v116 = vpop.permute.xlu0 %115
  %v118 = vmul.f32 %v116, %v110
  %v119 = vmul.f32 %v116, %v111
  %v120 = vmul.f32 %v116, %v112
  %v121 = vmul.f32 %v116, %v113
  %122 = vset.pattern.permute.xlu0 2
  %123 = vperm.xlu0 %122, %v63
  %v124 = vpop.permute.xlu0 %123
  %v126 = vadd.f32 %v118, %v124
  %v127 = vadd.f32 %v119, %v124
  %v128 = vadd.f32 %v120, %v124
  %v129 = vadd.f32 %v121, %v124
  %130 = vrot.lane.b32.xlu0 %v110, 17
  %v131 = vpop.permute.xlu0 %130
  %132 = vrot.lane.b32.xlu0 %v111, 17
  %v133 = vpop.permute.xlu0 %132
  %134 = vrot.lane.b32.xlu0 %v112, 17
  %v135 = vpop.permute.xlu0 %134
  %136 = vrot.lane.b32.xlu0 %v113, 17
  %v137 = vpop.permute.xlu0 %136
  %vm138 = vcmp.lt.s32.totalorder %v15, 17
  %v139 = vsel %vm138, %v135, %v137
  %v140 = vsel %vm138, %v133, %v135
  %v141 = vsel %vm138, %v131, %v133
  %v142 = vsel %vm138, %v137, %v131
  %v143 = vsel %vm39, 1, 0
  %v144 = vsel %vm40, 1, 0
  %v145 = vsel %vm41, 1, 0
  %v146 = vsel %vm42, 1, 0
  %vm147 = vcmp.eq.s32.totalorder %v143, 1
  %vm148 = vcmp.eq.s32.totalorder %v144, 1
  %vm149 = vcmp.eq.s32.totalorder %v145, 1
  %vm150 = vcmp.eq.s32.totalorder %v146, 1
  %v151 = vsel %vm147, %v142, 0.0
  %v152 = vsel %vm148, %v141, 0.0
  %v153 = vsel %vm149, %v140, 0.0
  %v154 = vsel %vm150, %v139, 0.0
  %155 = vset.pattern.permute.xlu0 4
  %156 = vperm.xlu0 %155, %v63
  %v157 = vpop.permute.xlu0 %156
  %v159 = vmul.f32 %v157, %v151
  %v160 = vmul.f32 %v157, %v152
  %v161 = vmul.f32 %v157, %v153
  %v162 = vmul.f32 %v157, %v154
  %v163 = vadd.f32 %v126, %v159
  %v164 = vadd.f32 %v127, %v160
  %v165 = vadd.f32 %v128, %v161
  %v166 = vadd.f32 %v129, %v162
  %167 = vrot.lane.b32.xlu0 %v110, 16
  %v168 = vpop.permute.xlu0 %167
  %169 = vrot.lane.b32.xlu0 %v111, 16
  %v170 = vpop.permute.xlu0 %169
  %171 = vrot.lane.b32.xlu0 %v112, 16
  %v172 = vpop.permute.xlu0 %171
  %173 = vrot.lane.b32.xlu0 %v113, 16
  %v174 = vpop.permute.xlu0 %173
  %vm175 = vcmp.lt.s32.totalorder %v15, 16
  %v176 = vsel %vm175, %v172, %v174
  %v177 = vsel %vm175, %v170, %v172
  %v178 = vsel %vm175, %v168, %v170
  %v179 = vsel %vm175, %v174, %v168
  %v180 = vsel %vm31, 1, 0
  %v181 = vsel %vm32, 1, 0
  %v182 = vsel %vm33, 1, 0
  %v183 = vsel %vm34, 1, 0
  %vm184 = vcmp.eq.s32.totalorder %v180, 1
  %vm185 = vcmp.eq.s32.totalorder %v181, 1
  %vm186 = vcmp.eq.s32.totalorder %v182, 1
  %vm187 = vcmp.eq.s32.totalorder %v183, 1
  %v188 = vsel %vm184, %v179, 0.0
  %v189 = vsel %vm185, %v178, 0.0
  %v190 = vsel %vm186, %v177, 0.0
  %v191 = vsel %vm187, %v176, 0.0
  %192 = vset.pattern.permute.xlu0 5
  %193 = vperm.xlu0 %192, %v63
  %v194 = vpop.permute.xlu0 %193
  %v196 = vmul.f32 %v194, %v188
  %v197 = vmul.f32 %v194, %v189
  %v198 = vmul.f32 %v194, %v190
  %v199 = vmul.f32 %v194, %v191
  %v200 = vadd.f32 %v163, %v196
  %v201 = vadd.f32 %v164, %v197
  %v202 = vadd.f32 %v165, %v198
  %v203 = vadd.f32 %v166, %v199
  %204 = vrot.lane.b32.xlu0 %v110, 15
  %v205 = vpop.permute.xlu0 %204
  %206 = vrot.lane.b32.xlu0 %v111, 15
  %v207 = vpop.permute.xlu0 %206
  %208 = vrot.lane.b32.xlu0 %v112, 15
  %v209 = vpop.permute.xlu0 %208
  %210 = vrot.lane.b32.xlu0 %v113, 15
  %v211 = vpop.permute.xlu0 %210
  %vm212 = vcmp.lt.s32.totalorder %v15, 15
  %v213 = vsel %vm212, %v209, %v211
  %v214 = vsel %vm212, %v207, %v209
  %v215 = vsel %vm212, %v205, %v207
  %v216 = vsel %vm212, %v211, %v205
  %v217 = vsel %vm47, 1, 0
  %v218 = vsel %vm48, 1, 0
  %v219 = vsel %vm49, 1, 0
  %v220 = vsel %vm50, 1, 0
  %vm221 = vcmp.eq.s32.totalorder %v217, 1
  %vm222 = vcmp.eq.s32.totalorder %v218, 1
  %vm223 = vcmp.eq.s32.totalorder %v219, 1
  %vm224 = vcmp.eq.s32.totalorder %v220, 1
  %v225 = vsel %vm221, %v216, 0.0
  %v226 = vsel %vm222, %v215, 0.0
  %v227 = vsel %vm223, %v214, 0.0
  %v228 = vsel %vm224, %v213, 0.0
  %229 = vset.pattern.permute.xlu0 6
  %230 = vperm.xlu0 %229, %v63
  %v231 = vpop.permute.xlu0 %230
  %v233 = vmul.f32 %v231, %v225
  %v234 = vmul.f32 %v231, %v226
  %v235 = vmul.f32 %v231, %v227
  %v236 = vmul.f32 %v231, %v228
  %v237 = vadd.f32 %v200, %v233
  %v238 = vadd.f32 %v201, %v234
  %v239 = vadd.f32 %v202, %v235
  %v240 = vadd.f32 %v203, %v236
  %241 = vrot.lane.b32.xlu0 %v110, 1
  %v242 = vpop.permute.xlu0 %241
  %243 = vrot.lane.b32.xlu0 %v111, 1
  %v244 = vpop.permute.xlu0 %243
  %245 = vrot.lane.b32.xlu0 %v112, 1
  %v246 = vpop.permute.xlu0 %245
  %247 = vrot.lane.b32.xlu0 %v113, 1
  %v248 = vpop.permute.xlu0 %247
  %vm249 = vcmp.lt.s32.totalorder %v15, 1
  %v250 = vsel %vm249, %v246, %v248
  %v251 = vsel %vm249, %v244, %v246
  %v252 = vsel %vm249, %v242, %v244
  %v253 = vsel %vm249, %v248, %v242
  %v254 = vsel %vm35, 1, 0
  %v255 = vsel %vm36, 1, 0
  %v256 = vsel %vm37, 1, 0
  %v257 = vsel %vm38, 1, 0
  %vm258 = vcmp.eq.s32.totalorder %v254, 1
  %vm259 = vcmp.eq.s32.totalorder %v255, 1
  %vm260 = vcmp.eq.s32.totalorder %v256, 1
  %vm261 = vcmp.eq.s32.totalorder %v257, 1
  %v262 = vsel %vm258, %v253, 0.0
  %v263 = vsel %vm259, %v252, 0.0
  %v264 = vsel %vm260, %v251, 0.0
  %v265 = vsel %vm261, %v250, 0.0
  %266 = vset.pattern.permute.xlu0 7
  %267 = vperm.xlu0 %266, %v63
  %v268 = vpop.permute.xlu0 %267
  %v270 = vmul.f32 %v268, %v262
  %v271 = vmul.f32 %v268, %v263
  %v272 = vmul.f32 %v268, %v264
  %v273 = vmul.f32 %v268, %v265
  %v274 = vadd.f32 %v237, %v270
  %v275 = vadd.f32 %v238, %v271
  %v276 = vadd.f32 %v239, %v272
  %v277 = vadd.f32 %v240, %v273
  %278 = vrot.lane.b32.xlu0 %v110, 127
  %v279 = vpop.permute.xlu0 %278
  %280 = vrot.lane.b32.xlu0 %v111, 127
  %v281 = vpop.permute.xlu0 %280
  %282 = vrot.lane.b32.xlu0 %v112, 127
  %v283 = vpop.permute.xlu0 %282
  %284 = vrot.lane.b32.xlu0 %v113, 127
  %v285 = vpop.permute.xlu0 %284
  %vm286 = vcmp.lt.s32.totalorder %v15, 127
  %v287 = vsel %vm286, %v283, %v285
  %v288 = vsel %vm286, %v281, %v283
  %v289 = vsel %vm286, %v279, %v281
  %v290 = vsel %vm286, %v285, %v279
  %v291 = vsel %vm43, 1, 0
  %v292 = vsel %vm44, 1, 0
  %v293 = vsel %vm45, 1, 0
  %v294 = vsel %vm46, 1, 0
  %vm295 = vcmp.eq.s32.totalorder %v291, 1
  %vm296 = vcmp.eq.s32.totalorder %v292, 1
  %vm297 = vcmp.eq.s32.totalorder %v293, 1
  %vm298 = vcmp.eq.s32.totalorder %v294, 1
  %v299 = vsel %vm295, %v289, 0.0
  %v300 = vsel %vm296, %v288, 0.0
  %v301 = vsel %vm297, %v287, 0.0
  %v302 = vsel %vm298, %v290, 0.0
  %303 = vset.pattern.permute.xlu0 9
  %304 = vperm.xlu0 %303, %v63
  %v305 = vpop.permute.xlu0 %304
  %v307 = vmul.f32 %v305, %v299
  %v308 = vmul.f32 %v305, %v300
  %v309 = vmul.f32 %v305, %v301
  %v310 = vmul.f32 %v305, %v302
  %v311 = vadd.f32 %v274, %v307
  %v312 = vadd.f32 %v275, %v308
  %v313 = vadd.f32 %v276, %v309
  %v314 = vadd.f32 %v277, %v310
  %315 = vrot.lane.b32.xlu0 %v110, 113
  %v316 = vpop.permute.xlu0 %315
  %317 = vrot.lane.b32.xlu0 %v111, 113
  %v318 = vpop.permute.xlu0 %317
  %319 = vrot.lane.b32.xlu0 %v112, 113
  %v320 = vpop.permute.xlu0 %319
  %321 = vrot.lane.b32.xlu0 %v113, 113
  %v322 = vpop.permute.xlu0 %321
  %vm323 = vcmp.lt.s32.totalorder %v15, 113
  %v324 = vsel %vm323, %v320, %v322
  %v325 = vsel %vm323, %v318, %v320
  %v326 = vsel %vm323, %v316, %v318
  %v327 = vsel %vm323, %v322, %v316
  %v328 = vsel %vm55, 1, 0
  %v329 = vsel %vm56, 1, 0
  %v330 = vsel %vm57, 1, 0
  %v331 = vsel %vm58, 1, 0
  %vm332 = vcmp.eq.s32.totalorder %v328, 1
  %vm333 = vcmp.eq.s32.totalorder %v329, 1
  %vm334 = vcmp.eq.s32.totalorder %v330, 1
  %vm335 = vcmp.eq.s32.totalorder %v331, 1
  %v336 = vsel %vm332, %v326, 0.0
  %v337 = vsel %vm333, %v325, 0.0
  %v338 = vsel %vm334, %v324, 0.0
  %v339 = vsel %vm335, %v327, 0.0
  %340 = vset.pattern.permute.xlu0 10
  %341 = vperm.xlu0 %340, %v63
  %v342 = vpop.permute.xlu0 %341
  %v344 = vmul.f32 %v342, %v336
  %v345 = vmul.f32 %v342, %v337
  %v346 = vmul.f32 %v342, %v338
  %v347 = vmul.f32 %v342, %v339
  %v348 = vadd.f32 %v311, %v344
  %v349 = vadd.f32 %v312, %v345
  %v350 = vadd.f32 %v313, %v346
  %v351 = vadd.f32 %v314, %v347
  %352 = vrot.lane.b32.xlu0 %v110, 112
  %v353 = vpop.permute.xlu0 %352
  %354 = vrot.lane.b32.xlu0 %v111, 112
  %v355 = vpop.permute.xlu0 %354
  %356 = vrot.lane.b32.xlu0 %v112, 112
  %v357 = vpop.permute.xlu0 %356
  %358 = vrot.lane.b32.xlu0 %v113, 112
  %v359 = vpop.permute.xlu0 %358
  %vm360 = vcmp.lt.s32.totalorder %v15, 112
  %v361 = vsel %vm360, %v357, %v359
  %v362 = vsel %vm360, %v355, %v357
  %v363 = vsel %vm360, %v353, %v355
  %v364 = vsel %vm360, %v359, %v353
  %v365 = vsel %vm51, 1, 0
  %v366 = vsel %vm52, 1, 0
  %v367 = vsel %vm53, 1, 0
  %v368 = vsel %vm54, 1, 0
  %vm369 = vcmp.eq.s32.totalorder %v365, 1
  %vm370 = vcmp.eq.s32.totalorder %v366, 1
  %vm371 = vcmp.eq.s32.totalorder %v367, 1
  %vm372 = vcmp.eq.s32.totalorder %v368, 1
  %v373 = vsel %vm369, %v363, 0.0
  %v374 = vsel %vm370, %v362, 0.0
  %v375 = vsel %vm371, %v361, 0.0
  %v376 = vsel %vm372, %v364, 0.0
  %377 = vset.pattern.permute.xlu0 11
  %378 = vperm.xlu0 %377, %v63
  %v379 = vpop.permute.xlu0 %378
  %v381 = vmul.f32 %v379, %v373
  %v382 = vmul.f32 %v379, %v374
  %v383 = vmul.f32 %v379, %v375
  %v384 = vmul.f32 %v379, %v376
  %v385 = vadd.f32 %v348, %v381
  %v386 = vadd.f32 %v349, %v382
  %v387 = vadd.f32 %v350, %v383
  %v388 = vadd.f32 %v351, %v384
  %389 = vrot.lane.b32.xlu0 %v110, 111
  %v390 = vpop.permute.xlu0 %389
  %391 = vrot.lane.b32.xlu0 %v111, 111
  %v392 = vpop.permute.xlu0 %391
  %393 = vrot.lane.b32.xlu0 %v112, 111
  %v394 = vpop.permute.xlu0 %393
  %395 = vrot.lane.b32.xlu0 %v113, 111
  %v396 = vpop.permute.xlu0 %395
  %vm397 = vcmp.lt.s32.totalorder %v15, 111
  %v398 = vsel %vm397, %v394, %v396
  %v399 = vsel %vm397, %v392, %v394
  %v400 = vsel %vm397, %v390, %v392
  %v401 = vsel %vm397, %v396, %v390
  %v402 = vsel %vm59, 1, 0
  %v403 = vsel %vm60, 1, 0
  %v404 = vsel %vm61, 1, 0
  %v405 = vsel %vm62, 1, 0
  %vm406 = vcmp.eq.s32.totalorder %v402, 1
  %vm407 = vcmp.eq.s32.totalorder %v403, 1
  %vm408 = vcmp.eq.s32.totalorder %v404, 1
  %vm409 = vcmp.eq.s32.totalorder %v405, 1
  %v410 = vsel %vm406, %v400, 0.0
  %v411 = vsel %vm407, %v399, 0.0
  %v412 = vsel %vm408, %v398, 0.0
  %v413 = vsel %vm409, %v401, 0.0
  %414 = vset.pattern.permute.xlu0 12
  %415 = vperm.xlu0 %414, %v63
  %v416 = vpop.permute.xlu0 %415
  %v418 = vmul.f32 %v416, %v410
  %v419 = vmul.f32 %v416, %v411
  %v420 = vmul.f32 %v416, %v412
  %v421 = vmul.f32 %v416, %v413
  %v422 = vadd.f32 %v385, %v418
  %v423 = vadd.f32 %v386, %v419
  %v424 = vadd.f32 %v387, %v420
  %v425 = vadd.f32 %v388, %v421
  %427 = vset.pattern.permute.xlu0 0
  %428 = vperm.xlu0 %427, %v64
  %v429 = vpop.permute.xlu0 %428
  %431 = vrot.lane.b32.xlu0 %v64, 115
  %v432 = vpop.permute.xlu0 %431
  %vm433 = vcmask 64512
  %v434 = vsel %vm433, %v432, 0
  %436 = vmatprep.subr.mxu0 %v423
  %437 = vmatpush1.msra.mxu0 %v422
  %438 = vmatprep.subr.mxu0 0.0
  %439 = vmatpush1.msra.mxu0 0.0
  %440 = vmatprep.subr.mxu0 0.0
  %441 = vmatpush1.msra.mxu0 0.0
  %442 = vmatprep.subr.mxu0 0.0
  %443 = vmatpush1.msra.mxu0 0.0
  %444 = vmatprep.subr.mxu0 0.0
  %445 = vmatpush1.msra.mxu0 0.0
  %446 = vmatprep.subr.mxu0 0.0
  %447 = vmatpush1.msra.mxu0 0.0
  %448 = vmatprep.subr.mxu0 0.0
  %449 = vmatpush1.msra.mxu0 0.0
  %450 = vmatprep.subr.mxu0 0.0
  %451 = vmatpush1.msra.mxu0 0.0
  %452 = vmatprep.subr.mxu0 0.0
  %453 = vmatpush1.msra.mxu0 0.0
  %454 = vmatprep.subr.mxu0 0.0
  %455 = vmatpush1.msra.mxu0 0.0
  %456 = vmatprep.subr.mxu0 0.0
  %457 = vmatpush1.msra.mxu0 0.0
  %458 = vmatprep.subr.mxu0 0.0
  %459 = vmatpush1.msra.mxu0 0.0
  %460 = vmatprep.subr.mxu0 0.0
  %461 = vmatpush1.msra.mxu0 0.0
  %462 = vmatprep.subr.mxu0 0.0
  %463 = vmatpush1.msra.mxu0 0.0
  %464 = vmatprep.subr.mxu0 0.0
  %465 = vmatpush1.msra.mxu0 0.0
  %466 = vmatprep.subr.mxu0 0.0
  %467 = vmatpush1.msra.mxu0 0.0
  %468 = vmatprep.subr.mxu0 0.0
  %469 = vmatpush1.msra.mxu0 0.0
  %470 = vmatprep.subr.mxu0 0.0
  %471 = vmatpush1.msra.mxu0 0.0
  %472 = vmatprep.subr.mxu0 0.0
  %473 = vmatpush1.msra.mxu0 0.0
  %474 = vmatprep.subr.mxu0 0.0
  %475 = vmatpush1.msra.mxu0 0.0
  %476 = vmatprep.subr.mxu0 0.0
  %477 = vmatpush1.msra.mxu0 0.0
  %478 = vmatprep.subr.mxu0 0.0
  %479 = vmatpush1.msra.mxu0 0.0
  %480 = vmatprep.subr.mxu0 0.0
  %481 = vmatpush1.msra.mxu0 0.0
  %482 = vmatprep.subr.mxu0 0.0
  %483 = vmatpush1.msra.mxu0 0.0
  %484 = vmatprep.subr.mxu0 0.0
  %485 = vmatpush1.msra.mxu0 0.0
  %486 = vmatprep.subr.mxu0 0.0
  %487 = vmatpush1.msra.mxu0 0.0
  %488 = vmatprep.subr.mxu0 0.0
  %489 = vmatpush1.msra.mxu0 0.0
  %490 = vmatprep.subr.mxu0 0.0
  %491 = vmatpush1.msra.mxu0 0.0
  %492 = vmatprep.subr.mxu0 0.0
  %493 = vmatpush1.msra.mxu0 0.0
  %494 = vmatprep.subr.mxu0 0.0
  %495 = vmatpush1.msra.mxu0 0.0
  %496 = vmatprep.subr.mxu0 0.0
  %497 = vmatpush1.msra.mxu0 0.0
  %498 = vmatprep.subr.mxu0 0.0
  %499 = vmatpush1.msra.mxu0 0.0
  %500 = vmatprep.mubr.f32.mxu0 0.0
  %501 = vmatmul.mubr.f32.gmra.mrb[0].mxu0 %v434
  %v502 = vpop.f32.mrb[0].mxu0
  %v503 = vadd.f32 %v429, %v502
  %v504 = vpop.f32.mrb[0].mxu0
  %v505 = vadd.f32 %v429, %v504
  %506 = vdwg.mxu0
  %507 = vmatprep.subr.mxu0 %v425
  %508 = vmatpush1.msra.mxu0 %v424
  %509 = vmatprep.subr.mxu0 0.0
  %510 = vmatpush1.msra.mxu0 0.0
  %511 = vmatprep.subr.mxu0 0.0
  %512 = vmatpush1.msra.mxu0 0.0
  %513 = vmatprep.subr.mxu0 0.0
  %514 = vmatpush1.msra.mxu0 0.0
  %515 = vmatprep.subr.mxu0 0.0
  %516 = vmatpush1.msra.mxu0 0.0
  %517 = vmatprep.subr.mxu0 0.0
  %518 = vmatpush1.msra.mxu0 0.0
  %519 = vmatprep.subr.mxu0 0.0
  %520 = vmatpush1.msra.mxu0 0.0
  %521 = vmatprep.subr.mxu0 0.0
  %522 = vmatpush1.msra.mxu0 0.0
  %523 = vmatprep.subr.mxu0 0.0
  %524 = vmatpush1.msra.mxu0 0.0
  %525 = vmatprep.subr.mxu0 0.0
  %526 = vmatpush1.msra.mxu0 0.0
  %527 = vmatprep.subr.mxu0 0.0
  %528 = vmatpush1.msra.mxu0 0.0
  %529 = vmatprep.subr.mxu0 0.0
  %530 = vmatpush1.msra.mxu0 0.0
  %531 = vmatprep.subr.mxu0 0.0
  %532 = vmatpush1.msra.mxu0 0.0
  %533 = vmatprep.subr.mxu0 0.0
  %534 = vmatpush1.msra.mxu0 0.0
  %535 = vmatprep.subr.mxu0 0.0
  %536 = vmatpush1.msra.mxu0 0.0
  %537 = vmatprep.subr.mxu0 0.0
  %538 = vmatpush1.msra.mxu0 0.0
  %539 = vmatprep.subr.mxu0 0.0
  %540 = vmatpush1.msra.mxu0 0.0
  %541 = vmatprep.subr.mxu0 0.0
  %542 = vmatpush1.msra.mxu0 0.0
  %543 = vmatprep.subr.mxu0 0.0
  %544 = vmatpush1.msra.mxu0 0.0
  %545 = vmatprep.subr.mxu0 0.0
  %546 = vmatpush1.msra.mxu0 0.0
  %547 = vmatprep.subr.mxu0 0.0
  %548 = vmatpush1.msra.mxu0 0.0
  %549 = vmatprep.subr.mxu0 0.0
  %550 = vmatpush1.msra.mxu0 0.0
  %551 = vmatprep.subr.mxu0 0.0
  %552 = vmatpush1.msra.mxu0 0.0
  %553 = vmatprep.subr.mxu0 0.0
  %554 = vmatpush1.msra.mxu0 0.0
  %555 = vmatprep.subr.mxu0 0.0
  %556 = vmatpush1.msra.mxu0 0.0
  %557 = vmatprep.subr.mxu0 0.0
  %558 = vmatpush1.msra.mxu0 0.0
  %559 = vmatprep.subr.mxu0 0.0
  %560 = vmatpush1.msra.mxu0 0.0
  %561 = vmatprep.subr.mxu0 0.0
  %562 = vmatpush1.msra.mxu0 0.0
  %563 = vmatprep.subr.mxu0 0.0
  %564 = vmatpush1.msra.mxu0 0.0
  %565 = vmatprep.subr.mxu0 0.0
  %566 = vmatpush1.msra.mxu0 0.0
  %567 = vmatprep.subr.mxu0 0.0
  %568 = vmatpush1.msra.mxu0 0.0
  %569 = vmatprep.subr.mxu0 0.0
  %570 = vmatpush1.msra.mxu0 0.0
  %571 = vmatprep.mubr.f32.mxu0 0.0
  %572 = vmatmul.mubr.f32.gmra.mrb[0].mxu0 %v434
  %v573 = vpop.f32.mrb[0].mxu0
  %v574 = vadd.f32 %v429, %v573
  %v575 = vpop.f32.mrb[0].mxu0
  %v576 = vadd.f32 %v429, %v575
  %577 = vdwg.mxu0
  %vm578 = vcmask 1043456
  %v579 = vsel %vm578, %v503, 0.0
  %v580 = vsel %vm578, %v505, 0.0
  %v581 = vadd.f32 %v579, %v580
  %v582 = vsel %vm578, %v574, 0.0
  %v583 = vadd.f32 %v581, %v582
  %v584 = vsel %vm578, %v576, 0.0
  %v585 = vadd.f32 %v583, %v584
  %586 = vadd.xlane.f32.xlu0 %v585
  %v587 = vpop.xlane.xlu0 %586
  %v588 = vmul.f32 %v587, 0.001953125
  %v589 = vsub.f32 %v503, %v588
  %v590 = vsub.f32 %v505, %v588
  %v591 = vsub.f32 %v574, %v588
  %v592 = vsub.f32 %v576, %v588
  %v593 = vmul.f32 %v589, %v589
  %v594 = vmul.f32 %v590, %v590
  %v595 = vmul.f32 %v591, %v591
  %v596 = vmul.f32 %v592, %v592
  %v597 = vsel %vm578, %v593, 0.0
  %v598 = vsel %vm578, %v594, 0.0
  %v599 = vadd.f32 %v597, %v598
  %v600 = vsel %vm578, %v595, 0.0
  %v601 = vadd.f32 %v599, %v600
  %v602 = vsel %vm578, %v596, 0.0
  %v603 = vadd.f32 %v601, %v602
  %604 = vadd.xlane.f32.xlu0 %v603
  %v605 = vpop.xlane.xlu0 %604
  %v606 = vmul.f32 %v605, 0.001953125
  %v607 = vadd.f32 %v606, 1e-05
  %v608 = vrsqrt.pop %v607
  %v609 = vmul.f32 %v608, %v64
  %611 = vset.pattern.permute.xlu0 1
  %612 = vperm.xlu0 %611, %v609
  %v613 = vpop.permute.xlu0 %612
  %v615 = vmul.f32 %v589, %v613
  %v616 = vmul.f32 %v590, %v613
  %v617 = vmul.f32 %v591, %v613
  %v618 = vmul.f32 %v592, %v613
  %619 = vset.pattern.permute.xlu0 2
  %620 = vperm.xlu0 %619, %v64
  %v621 = vpop.permute.xlu0 %620
  %v623 = vadd.f32 %v615, %v621
  %v624 = vadd.f32 %v616, %v621
  %v625 = vadd.f32 %v617, %v621
  %v626 = vadd.f32 %v618, %v621
  %v627 = vmax.f32 %v623, 0.0
  %v628 = vmax.f32 %v624, 0.0
  %v629 = vmax.f32 %v625, 0.0
  %v630 = vmax.f32 %v626, 0.0
  %631 = vset.pattern.permute.xlu0 8
  %632 = vperm.xlu0 %631, %v64
  %v633 = vpop.permute.xlu0 %632
  %v635 = vmul.f32 %v633, %v627
  %v636 = vmul.f32 %v633, %v628
  %v637 = vmul.f32 %v633, %v629
  %v638 = vmul.f32 %v633, %v630
  %639 = vset.pattern.permute.xlu0 3
  %640 = vperm.xlu0 %639, %v64
  %v641 = vpop.permute.xlu0 %640
  %v643 = vadd.f32 %v635, %v641
  %v644 = vadd.f32 %v636, %v641
  %v645 = vadd.f32 %v637, %v641
  %v646 = vadd.f32 %v638, %v641
  %647 = vrot.lane.b32.xlu0 %v627, 17
  %v648 = vpop.permute.xlu0 %647
  %649 = vrot.lane.b32.xlu0 %v628, 17
  %v650 = vpop.permute.xlu0 %649
  %651 = vrot.lane.b32.xlu0 %v629, 17
  %v652 = vpop.permute.xlu0 %651
  %653 = vrot.lane.b32.xlu0 %v630, 17
  %v654 = vpop.permute.xlu0 %653
  %v655 = vsel %vm138, %v652, %v654
  %v656 = vsel %vm138, %v650, %v652
  %v657 = vsel %vm138, %v648, %v650
  %v658 = vsel %vm138, %v654, %v648
  %v659 = vsel %vm147, %v658, 0.0
  %v660 = vsel %vm148, %v657, 0.0
  %v661 = vsel %vm149, %v656, 0.0
  %v662 = vsel %vm150, %v655, 0.0
  %663 = vset.pattern.permute.xlu0 4
  %664 = vperm.xlu0 %663, %v64
  %v665 = vpop.permute.xlu0 %664
  %v667 = vmul.f32 %v665, %v659
  %v668 = vmul.f32 %v665, %v660
  %v669 = vmul.f32 %v665, %v661
  %v670 = vmul.f32 %v665, %v662
  %v671 = vadd.f32 %v643, %v667
  %v672 = vadd.f32 %v644, %v668
  %v673 = vadd.f32 %v645, %v669
  %v674 = vadd.f32 %v646, %v670
  %675 = vrot.lane.b32.xlu0 %v627, 16
  %v676 = vpop.permute.xlu0 %675
  %677 = vrot.lane.b32.xlu0 %v628, 16
  %v678 = vpop.permute.xlu0 %677
  %679 = vrot.lane.b32.xlu0 %v629, 16
  %v680 = vpop.permute.xlu0 %679
  %681 = vrot.lane.b32.xlu0 %v630, 16
  %v682 = vpop.permute.xlu0 %681
  %v683 = vsel %vm175, %v680, %v682
  %v684 = vsel %vm175, %v678, %v680
  %v685 = vsel %vm175, %v676, %v678
  %v686 = vsel %vm175, %v682, %v676
  %v687 = vsel %vm184, %v686, 0.0
  %v688 = vsel %vm185, %v685, 0.0
  %v689 = vsel %vm186, %v684, 0.0
  %v690 = vsel %vm187, %v683, 0.0
  %691 = vset.pattern.permute.xlu0 5
  %692 = vperm.xlu0 %691, %v64
  %v693 = vpop.permute.xlu0 %692
  %v695 = vmul.f32 %v693, %v687
  %v696 = vmul.f32 %v693, %v688
  %v697 = vmul.f32 %v693, %v689
  %v698 = vmul.f32 %v693, %v690
  %v699 = vadd.f32 %v671, %v695
  %v700 = vadd.f32 %v672, %v696
  %v701 = vadd.f32 %v673, %v697
  %v702 = vadd.f32 %v674, %v698
  %703 = vrot.lane.b32.xlu0 %v627, 15
  %v704 = vpop.permute.xlu0 %703
  %705 = vrot.lane.b32.xlu0 %v628, 15
  %v706 = vpop.permute.xlu0 %705
  %707 = vrot.lane.b32.xlu0 %v629, 15
  %v708 = vpop.permute.xlu0 %707
  %709 = vrot.lane.b32.xlu0 %v630, 15
  %v710 = vpop.permute.xlu0 %709
  %v711 = vsel %vm212, %v708, %v710
  %v712 = vsel %vm212, %v706, %v708
  %v713 = vsel %vm212, %v704, %v706
  %v714 = vsel %vm212, %v710, %v704
  %v715 = vsel %vm221, %v714, 0.0
  %v716 = vsel %vm222, %v713, 0.0
  %v717 = vsel %vm223, %v712, 0.0
  %v718 = vsel %vm224, %v711, 0.0
  %719 = vset.pattern.permute.xlu0 6
  %720 = vperm.xlu0 %719, %v64
  %v721 = vpop.permute.xlu0 %720
  %v723 = vmul.f32 %v721, %v715
  %v724 = vmul.f32 %v721, %v716
  %v725 = vmul.f32 %v721, %v717
  %v726 = vmul.f32 %v721, %v718
  %v727 = vadd.f32 %v699, %v723
  %v728 = vadd.f32 %v700, %v724
  %v729 = vadd.f32 %v701, %v725
  %v730 = vadd.f32 %v702, %v726
  %731 = vrot.lane.b32.xlu0 %v627, 1
  %v732 = vpop.permute.xlu0 %731
  %733 = vrot.lane.b32.xlu0 %v628, 1
  %v734 = vpop.permute.xlu0 %733
  %735 = vrot.lane.b32.xlu0 %v629, 1
  %v736 = vpop.permute.xlu0 %735
  %737 = vrot.lane.b32.xlu0 %v630, 1
  %v738 = vpop.permute.xlu0 %737
  %v739 = vsel %vm249, %v736, %v738
  %v740 = vsel %vm249, %v734, %v736
  %v741 = vsel %vm249, %v732, %v734
  %v742 = vsel %vm249, %v738, %v732
  %v743 = vsel %vm258, %v742, 0.0
  %v744 = vsel %vm259, %v741, 0.0
  %v745 = vsel %vm260, %v740, 0.0
  %v746 = vsel %vm261, %v739, 0.0
  %747 = vset.pattern.permute.xlu0 7
  %748 = vperm.xlu0 %747, %v64
  %v749 = vpop.permute.xlu0 %748
  %v751 = vmul.f32 %v749, %v743
  %v752 = vmul.f32 %v749, %v744
  %v753 = vmul.f32 %v749, %v745
  %v754 = vmul.f32 %v749, %v746
  %v755 = vadd.f32 %v727, %v751
  %v756 = vadd.f32 %v728, %v752
  %v757 = vadd.f32 %v729, %v753
  %v758 = vadd.f32 %v730, %v754
  %759 = vrot.lane.b32.xlu0 %v627, 127
  %v760 = vpop.permute.xlu0 %759
  %761 = vrot.lane.b32.xlu0 %v628, 127
  %v762 = vpop.permute.xlu0 %761
  %763 = vrot.lane.b32.xlu0 %v629, 127
  %v764 = vpop.permute.xlu0 %763
  %765 = vrot.lane.b32.xlu0 %v630, 127
  %v766 = vpop.permute.xlu0 %765
  %v767 = vsel %vm286, %v764, %v766
  %v768 = vsel %vm286, %v762, %v764
  %v769 = vsel %vm286, %v760, %v762
  %v770 = vsel %vm286, %v766, %v760
  %v771 = vsel %vm295, %v769, 0.0
  %v772 = vsel %vm296, %v768, 0.0
  %v773 = vsel %vm297, %v767, 0.0
  %v774 = vsel %vm298, %v770, 0.0
  %775 = vset.pattern.permute.xlu0 9
  %776 = vperm.xlu0 %775, %v64
  %v777 = vpop.permute.xlu0 %776
  %v779 = vmul.f32 %v777, %v771
  %v780 = vmul.f32 %v777, %v772
  %v781 = vmul.f32 %v777, %v773
  %v782 = vmul.f32 %v777, %v774
  %v783 = vadd.f32 %v755, %v779
  %v784 = vadd.f32 %v756, %v780
  %v785 = vadd.f32 %v757, %v781
  %v786 = vadd.f32 %v758, %v782
  %787 = vrot.lane.b32.xlu0 %v627, 113
  %v788 = vpop.permute.xlu0 %787
  %789 = vrot.lane.b32.xlu0 %v628, 113
  %v790 = vpop.permute.xlu0 %789
  %791 = vrot.lane.b32.xlu0 %v629, 113
  %v792 = vpop.permute.xlu0 %791
  %793 = vrot.lane.b32.xlu0 %v630, 113
  %v794 = vpop.permute.xlu0 %793
  %v795 = vsel %vm323, %v792, %v794
  %v796 = vsel %vm323, %v790, %v792
  %v797 = vsel %vm323, %v788, %v790
  %v798 = vsel %vm323, %v794, %v788
  %v799 = vsel %vm332, %v797, 0.0
  %v800 = vsel %vm333, %v796, 0.0
  %v801 = vsel %vm334, %v795, 0.0
  %v802 = vsel %vm335, %v798, 0.0
  %803 = vset.pattern.permute.xlu0 10
  %804 = vperm.xlu0 %803, %v64
  %v805 = vpop.permute.xlu0 %804
  %v807 = vmul.f32 %v805, %v799
  %v808 = vmul.f32 %v805, %v800
  %v809 = vmul.f32 %v805, %v801
  %v810 = vmul.f32 %v805, %v802
  %v811 = vadd.f32 %v783, %v807
  %v812 = vadd.f32 %v784, %v808
  %v813 = vadd.f32 %v785, %v809
  %v814 = vadd.f32 %v786, %v810
  %815 = vrot.lane.b32.xlu0 %v627, 112
  %v816 = vpop.permute.xlu0 %815
  %817 = vrot.lane.b32.xlu0 %v628, 112
  %v818 = vpop.permute.xlu0 %817
  %819 = vrot.lane.b32.xlu0 %v629, 112
  %v820 = vpop.permute.xlu0 %819
  %821 = vrot.lane.b32.xlu0 %v630, 112
  %v822 = vpop.permute.xlu0 %821
  %v823 = vsel %vm360, %v820, %v822
  %v824 = vsel %vm360, %v818, %v820
  %v825 = vsel %vm360, %v816, %v818
  %v826 = vsel %vm360, %v822, %v816
  %v827 = vsel %vm369, %v825, 0.0
  %v828 = vsel %vm370, %v824, 0.0
  %v829 = vsel %vm371, %v823, 0.0
  %v830 = vsel %vm372, %v826, 0.0
  %831 = vset.pattern.permute.xlu0 11
  %832 = vperm.xlu0 %831, %v64
  %v833 = vpop.permute.xlu0 %832
  %v835 = vmul.f32 %v833, %v827
  %v836 = vmul.f32 %v833, %v828
  %v837 = vmul.f32 %v833, %v829
  %v838 = vmul.f32 %v833, %v830
  %v839 = vadd.f32 %v811, %v835
  %v840 = vadd.f32 %v812, %v836
  %v841 = vadd.f32 %v813, %v837
  %v842 = vadd.f32 %v814, %v838
  %843 = vrot.lane.b32.xlu0 %v627, 111
  %v844 = vpop.permute.xlu0 %843
  %845 = vrot.lane.b32.xlu0 %v628, 111
  %v846 = vpop.permute.xlu0 %845
  %847 = vrot.lane.b32.xlu0 %v629, 111
  %v848 = vpop.permute.xlu0 %847
  %849 = vrot.lane.b32.xlu0 %v630, 111
  %v850 = vpop.permute.xlu0 %849
  %v851 = vsel %vm397, %v848, %v850
  %v852 = vsel %vm397, %v846, %v848
  %v853 = vsel %vm397, %v844, %v846
  %v854 = vsel %vm397, %v850, %v844
  %v855 = vsel %vm406, %v853, 0.0
  %v856 = vsel %vm407, %v852, 0.0
  %v857 = vsel %vm408, %v851, 0.0
  %v858 = vsel %vm409, %v854, 0.0
  %859 = vset.pattern.permute.xlu0 12
  %860 = vperm.xlu0 %859, %v64
  %v861 = vpop.permute.xlu0 %860
  %v863 = vmul.f32 %v861, %v855
  %v864 = vmul.f32 %v861, %v856
  %v865 = vmul.f32 %v861, %v857
  %v866 = vmul.f32 %v861, %v858
  %v867 = vadd.f32 %v839, %v863
  %v868 = vadd.f32 %v840, %v864
  %v869 = vadd.f32 %v841, %v865
  %v870 = vadd.f32 %v842, %v866
  %871 = vset.pattern.permute.xlu0 3
  %872 = vperm.xlu0 %871, %v63
  %v873 = vpop.permute.xlu0 %872
  %875 = vrot.lane.b32.xlu0 %v63, 115
  %v876 = vpop.permute.xlu0 %875
  %vm877 = vcmask 31744
  %v878 = vsel %vm877, %v876, 0
  %v881 = vsel %vm578, %v867, 0
  %v884 = vsel %vm578, %v868, 0
  %v887 = vsel %vm578, %v869, 0
  %v890 = vsel %vm578, %v870, 0
  %892 = vmatprep.subr.mxu0 %v884
  %893 = vmatpush1.msra.mxu0 %v881
  %894 = vmatprep.subr.mxu0 0.0
  %895 = vmatpush1.msra.mxu0 0.0
  %896 = vmatprep.subr.mxu0 0.0
  %897 = vmatpush1.msra.mxu0 0.0
  %898 = vmatprep.subr.mxu0 0.0
  %899 = vmatpush1.msra.mxu0 0.0
  %900 = vmatprep.subr.mxu0 0.0
  %901 = vmatpush1.msra.mxu0 0.0
  %902 = vmatprep.subr.mxu0 0.0
  %903 = vmatpush1.msra.mxu0 0.0
  %904 = vmatprep.subr.mxu0 0.0
  %905 = vmatpush1.msra.mxu0 0.0
  %906 = vmatprep.subr.mxu0 0.0
  %907 = vmatpush1.msra.mxu0 0.0
  %908 = vmatprep.subr.mxu0 0.0
  %909 = vmatpush1.msra.mxu0 0.0
  %910 = vmatprep.subr.mxu0 0.0
  %911 = vmatpush1.msra.mxu0 0.0
  %912 = vmatprep.subr.mxu0 0.0
  %913 = vmatpush1.msra.mxu0 0.0
  %914 = vmatprep.subr.mxu0 0.0
  %915 = vmatpush1.msra.mxu0 0.0
  %916 = vmatprep.subr.mxu0 0.0
  %917 = vmatpush1.msra.mxu0 0.0
  %918 = vmatprep.subr.mxu0 0.0
  %919 = vmatpush1.msra.mxu0 0.0
  %920 = vmatprep.subr.mxu0 0.0
  %921 = vmatpush1.msra.mxu0 0.0
  %922 = vmatprep.subr.mxu0 0.0
  %923 = vmatpush1.msra.mxu0 0.0
  %924 = vmatprep.subr.mxu0 0.0
  %925 = vmatpush1.msra.mxu0 0.0
  %926 = vmatprep.subr.mxu0 0.0
  %927 = vmatpush1.msra.mxu0 0.0
  %928 = vmatprep.subr.mxu0 0.0
  %929 = vmatpush1.msra.mxu0 0.0
  %930 = vmatprep.subr.mxu0 0.0
  %931 = vmatpush1.msra.mxu0 0.0
  %932 = vmatprep.subr.mxu0 0.0
  %933 = vmatpush1.msra.mxu0 0.0
  %934 = vmatprep.subr.mxu0 0.0
  %935 = vmatpush1.msra.mxu0 0.0
  %936 = vmatprep.subr.mxu0 0.0
  %937 = vmatpush1.msra.mxu0 0.0
  %938 = vmatprep.subr.mxu0 0.0
  %939 = vmatpush1.msra.mxu0 0.0
  %940 = vmatprep.subr.mxu0 0.0
  %941 = vmatpush1.msra.mxu0 0.0
  %942 = vmatprep.subr.mxu0 0.0
  %943 = vmatpush1.msra.mxu0 0.0
  %944 = vmatprep.subr.mxu0 0.0
  %945 = vmatpush1.msra.mxu0 0.0
  %946 = vmatprep.subr.mxu0 0.0
  %947 = vmatpush1.msra.mxu0 0.0
  %948 = vmatprep.subr.mxu0 0.0
  %949 = vmatpush1.msra.mxu0 0.0
  %950 = vmatprep.subr.mxu0 0.0
  %951 = vmatpush1.msra.mxu0 0.0
  %952 = vmatprep.subr.mxu0 0.0
  %953 = vmatpush1.msra.mxu0 0.0
  %954 = vmatprep.subr.mxu0 0.0
  %955 = vmatpush1.msra.mxu0 0.0
  %956 = vmatprep.mubr.f32.mxu0 0.0
  %957 = vmatmul.mubr.f32.gmra.mrb[0].mxu0 %v878
  %v958 = vpop.f32.mrb[0].mxu0
  %v959 = vadd.f32 %v873, %v958
  %v960 = vpop.f32.mrb[0].mxu0
  %v961 = vadd.f32 %v873, %v960
  %962 = vdwg.mxu0
  %963 = vmatprep.subr.mxu0 %v890
  %964 = vmatpush1.msra.mxu0 %v887
  %965 = vmatprep.subr.mxu0 0.0
  %966 = vmatpush1.msra.mxu0 0.0
  %967 = vmatprep.subr.mxu0 0.0
  %968 = vmatpush1.msra.mxu0 0.0
  %969 = vmatprep.subr.mxu0 0.0
  %970 = vmatpush1.msra.mxu0 0.0
  %971 = vmatprep.subr.mxu0 0.0
  %972 = vmatpush1.msra.mxu0 0.0
  %973 = vmatprep.subr.mxu0 0.0
  %974 = vmatpush1.msra.mxu0 0.0
  %975 = vmatprep.subr.mxu0 0.0
  %976 = vmatpush1.msra.mxu0 0.0
  %977 = vmatprep.subr.mxu0 0.0
  %978 = vmatpush1.msra.mxu0 0.0
  %979 = vmatprep.subr.mxu0 0.0
  %980 = vmatpush1.msra.mxu0 0.0
  %981 = vmatprep.subr.mxu0 0.0
  %982 = vmatpush1.msra.mxu0 0.0
  %983 = vmatprep.subr.mxu0 0.0
  %984 = vmatpush1.msra.mxu0 0.0
  %985 = vmatprep.subr.mxu0 0.0
  %986 = vmatpush1.msra.mxu0 0.0
  %987 = vmatprep.subr.mxu0 0.0
  %988 = vmatpush1.msra.mxu0 0.0
  %989 = vmatprep.subr.mxu0 0.0
  %990 = vmatpush1.msra.mxu0 0.0
  %991 = vmatprep.subr.mxu0 0.0
  %992 = vmatpush1.msra.mxu0 0.0
  %993 = vmatprep.subr.mxu0 0.0
  %994 = vmatpush1.msra.mxu0 0.0
  %995 = vmatprep.subr.mxu0 0.0
  %996 = vmatpush1.msra.mxu0 0.0
  %997 = vmatprep.subr.mxu0 0.0
  %998 = vmatpush1.msra.mxu0 0.0
  %999 = vmatprep.subr.mxu0 0.0
  %1000 = vmatpush1.msra.mxu0 0.0
  %1001 = vmatprep.subr.mxu0 0.0
  %1002 = vmatpush1.msra.mxu0 0.0
  %1003 = vmatprep.subr.mxu0 0.0
  %1004 = vmatpush1.msra.mxu0 0.0
  %1005 = vmatprep.subr.mxu0 0.0
  %1006 = vmatpush1.msra.mxu0 0.0
  %1007 = vmatprep.subr.mxu0 0.0
  %1008 = vmatpush1.msra.mxu0 0.0
  %1009 = vmatprep.subr.mxu0 0.0
  %1010 = vmatpush1.msra.mxu0 0.0
  %1011 = vmatprep.subr.mxu0 0.0
  %1012 = vmatpush1.msra.mxu0 0.0
  %1013 = vmatprep.subr.mxu0 0.0
  %1014 = vmatpush1.msra.mxu0 0.0
  %1015 = vmatprep.subr.mxu0 0.0
  %1016 = vmatpush1.msra.mxu0 0.0
  %1017 = vmatprep.subr.mxu0 0.0
  %1018 = vmatpush1.msra.mxu0 0.0
  %1019 = vmatprep.subr.mxu0 0.0
  %1020 = vmatpush1.msra.mxu0 0.0
  %1021 = vmatprep.subr.mxu0 0.0
  %1022 = vmatpush1.msra.mxu0 0.0
  %1023 = vmatprep.subr.mxu0 0.0
  %1024 = vmatpush1.msra.mxu0 0.0
  %1025 = vmatprep.subr.mxu0 0.0
  %1026 = vmatpush1.msra.mxu0 0.0
  %1027 = vmatprep.mubr.f32.mxu0 0.0
  %1028 = vmatmul.mubr.f32.gmra.mrb[0].mxu0 %v878
  %v1029 = vpop.f32.mrb[0].mxu0
  %v1030 = vadd.f32 %v873, %v1029
  %v1031 = vpop.f32.mrb[0].mxu0
  %v1032 = vadd.f32 %v873, %v1031
  %1033 = vdwg.mxu0
  %1034 = vst [vmem:[%s3] sm:$0xff] %v959
  %1035 = vst [vmem:[%s3 + $0x8] sm:$0xff] %v961
  %1036 = vst [vmem:[%s3 + $0x10] sm:$0xff] %v1030
  %1037 = vst [vmem:[%s3 + $0x18] sm:$0xff] %v1032
  // Predicated region
  $region14: #{res_block_forward.1} parent=0 // pred_check
    _
  $region15: #{res_block_forward.1} parent=0 // pred_check_branch
    %1039 = sbr.rel (0) target = $region17
  $region16: #{res_block_forward.1} parent=0 // pred_region
    _
  $region17: #{res_block_forward.1} parent=0 // pred_fallthru
    _
  // Predicated region
  $region18: #{res_block_forward.1} parent=0 // pred_check
    _
  $region19: #{res_block_forward.1} parent=0 // pred_check_branch
    %1041 = sbr.rel (0) target = $region21
  $region20: #{res_block_forward.1} parent=0 // pred_region
    _
  $region21: #{res_block_forward.1} parent=0 // pred_fallthru
    _

</llo_original>
